<compile_context>
chip_gen: v7x
topology: tpu7x:2x2x1
jax: 0.10.0
libtpu: 0.0.40
codegen_flags: <defaults>
</compile_context>

<pallas_src>
import jax
import jax.numpy as jnp
from jax.experimental import pallas as pl
from jax.experimental.pallas import tpu as pltpu


def _round_up(n, m):
    return ((n + m - 1) // m) * m


def _cdiv(a, b):
    return -(-a // b)


def mlp_kernel(x_ref, w1_ref, b1_ref, w2_ref, b2_ref, w3t_ref, b3_ref, o_ref):
    # In-kernel f32 -> bf16 cast of x: avoids a separate XLA cast pass over HBM.
    x = x_ref[...].astype(jnp.bfloat16)
    # Layer 1: (TB,53)bf16 @ (53,32)bf16 -> f32 ; bias + ReLU in f32.
    h1 = jnp.dot(x, w1_ref[...], preferred_element_type=jnp.float32)
    h1 = jnp.maximum(h1 + b1_ref[...], 0.0)
    # Layer 2: (TB,32)bf16 @ (32,10)bf16 -> f32 ; bias + ReLU in f32.
    h2 = jnp.dot(h1.astype(jnp.bfloat16), w2_ref[...],
                 preferred_element_type=jnp.float32)
    h2 = jnp.maximum(h2 + b2_ref[...], 0.0)
    # Layer 3: (TB,10)bf16 @ (10,1)bf16 -> (TB,1) f32.  Plain MXU pass, no
    # implicit transpose of the (TB,10) tile (w3 is pre-transposed in wrapper).
    out = jnp.dot(h2.astype(jnp.bfloat16), w3t_ref[...],
                  preferred_element_type=jnp.float32)
    o_ref[...] = (out + b3_ref[...]).astype(o_ref.dtype)


def net_forward(x, params, *, block_b=8192):
    """x: (B, 53) float32.  Returns (B,) float32 (squeeze(1) applied)."""
    w1, b1, w2, b2, w3, b3 = params
    assert block_b % 128 == 0
    B, F = x.shape
    assert F == 53

    # Batch tile: multiple of 128, capped for small batches.  No padding of x:
    # Pallas handles the partial last block (garbage rows are discarded below).
    TB = min(block_b, _round_up(B, 128))
    # v7x has 2 TensorCores per chip: for medium batches make sure there are
    # >= 2 grid steps so the "parallel" batch axis can shard across both cores.
    if B > 256 and _cdiv(B, TB) < 2:
        TB = max(128, _round_up(_cdiv(B, 2), 128))
    num_tiles = _cdiv(B, TB)

    cost = pl.CostEstimate(
        flops=2 * B * (53 * 32 + 32 * 10 + 10 * 1),
        transcendentals=0,
        bytes_accessed=B * 53 * 4 + B * 4
        + 4 * (53 * 32 + 32 + 32 * 10 + 10 + 10 + 1),
    )

    out_col = pl.pallas_call(
        mlp_kernel,
        out_shape=jax.ShapeDtypeStruct((B, 1), jnp.float32),
        grid=(num_tiles,),
        in_specs=[
            pl.BlockSpec((TB, 53), lambda i: (i, 0)),   # x: streamed f32 tiles
            pl.BlockSpec((53, 32), lambda i: (0, 0)),   # w1 (bf16): VMEM-resident
            pl.BlockSpec((1, 32), lambda i: (0, 0)),    # b1 (f32): resident
            pl.BlockSpec((32, 10), lambda i: (0, 0)),   # w2 (bf16): resident
            pl.BlockSpec((1, 10), lambda i: (0, 0)),    # b2 (f32): resident
            pl.BlockSpec((10, 1), lambda i: (0, 0)),    # w3^T (bf16): resident
            pl.BlockSpec((1, 1), lambda i: (0, 0)),     # b3 (f32): resident
        ],
        out_specs=pl.BlockSpec((TB, 1), lambda i: (i, 0)),
        compiler_params=pltpu.CompilerParams(
            dimension_semantics=("parallel",),
            vmem_limit_bytes=48 * 1024 * 1024,
        ),
        cost_estimate=cost,
    )(
        x,                                  # f32, cast to bf16 in-kernel
        w1.astype(jnp.bfloat16), b1,
        w2.astype(jnp.bfloat16), b2,
        w3.astype(jnp.bfloat16).T, b3,      # (10, 1) so layer-3 needs no transpose
    )

    return out_col[:, 0]  # (B, 1) -> (B,), i.e. squeeze(1)


def init_params(key):
    """PyTorch-like U(-1/sqrt(fan_in), 1/sqrt(fan_in)) init.
    w1/w2 stored (in, out); w3 stored (out, in) = (1, 10); biases (1, out)."""
    def linear(key, fan_in, fan_out, w_shape):
        kw, kb = jax.random.split(key)
        bound = 1.0 / jnp.sqrt(float(fan_in))
        w = jax.random.uniform(kw, w_shape, jnp.float32, -bound, bound)
        b = jax.random.uniform(kb, (1, fan_out), jnp.float32, -bound, bound)
        return w, b

    k1, k2, k3 = jax.random.split(key, 3)
    w1, b1 = linear(k1, 53, 32, (53, 32))
    w2, b2 = linear(k2, 32, 10, (32, 10))
    w3, b3 = linear(k3, 10, 1, (1, 10))
    return (w1, b1, w2, b2, w3, b3)


def net_forward_ref(x, params):
    """Pure-JAX reference mirroring the kernel's bf16-input / f32-accumulate math."""
    w1, b1, w2, b2, w3, b3 = params
    h = jnp.dot(x.astype(jnp.bfloat16), w1.astype(jnp.bfloat16),
                preferred_element_type=jnp.float32)
    h = jnp.maximum(h + b1, 0.0)
    h = jnp.dot(h.astype(jnp.bfloat16), w2.astype(jnp.bfloat16),
                preferred_element_type=jnp.float32)
    h = jnp.maximum(h + b2, 0.0)
    out = jnp.dot(h.astype(jnp.bfloat16), w3.astype(jnp.bfloat16).T,
                  preferred_element_type=jnp.float32) + b3
    return out[:, 0]


if __name__ == "__main__":
    key = jax.random.PRNGKey(0)
    kx, kp = jax.random.split(key)
    params = init_params(kp)

    # Small case (B=8 -> single partial 128-row block; no wrapper-side padding).
    B = 8
    x = jax.random.normal(kx, (B, 53), dtype=jnp.float32)
    out = jax.block_until_ready(net_forward(x, params))
    ref = net_forward_ref(x, params)
    assert out.shape == (B,), out.shape
    assert jnp.allclose(out, ref, atol=1e-2, rtol=1e-2), (out, ref)

    # Multi-tile + ragged-tail case (exercises the batch grid, weight residency,
    # and the partial-last-block path without jnp.pad).
    B2 = 300
    x2 = jax.random.normal(jax.random.PRNGKey(1), (B2, 53), dtype=jnp.float32)
    out2 = jax.block_until_ready(net_forward(x2, params, block_b=128))
    ref2 = net_forward_ref(x2, params)
    assert out2.shape == (B2,), out2.shape
    assert jnp.allclose(out2, ref2, atol=1e-2, rtol=1e-2), (out2, ref2)

    # Medium case with the default tile: exercises the ">= 2 grid steps for
    # megacore" cap (TB is split so two tiles are produced).
    B3 = 384
    x3 = jax.random.normal(jax.random.PRNGKey(2), (B3, 53), dtype=jnp.float32)
    out3 = jax.block_until_ready(net_forward(x3, params))
    ref3 = net_forward_ref(x3, params)
    assert out3.shape == (B3,), out3.shape
    assert jnp.allclose(out3, ref3, atol=1e-2, rtol=1e-2), (out3, ref3)

    print("KERNEL_OK")
</pallas_src>

<mosaic_0001>
module attributes {stable_mosaic.version = 11 : i64} {
  func.func @mlp_kernel(%arg0: i32, %arg1: memref<128x53xf32, #tpu.memory_space<vmem>>, %arg2: memref<53x32xbf16, #tpu.memory_space<vmem>>, %arg3: memref<1x32xf32, #tpu.memory_space<vmem>>, %arg4: memref<32x10xbf16, #tpu.memory_space<vmem>>, %arg5: memref<1x10xf32, #tpu.memory_space<vmem>>, %arg6: memref<10x1xbf16, #tpu.memory_space<vmem>>, %arg7: memref<1x1xf32, #tpu.memory_space<vmem>>, %arg8: memref<128x1xf32, #tpu.memory_space<vmem>>) attributes {dimension_semantics = [#tpu.dimension_semantics<parallel>], iteration_bounds = array<i64: 1>, scalar_prefetch = 0 : i64, scratch_operands = 0 : i64, tpu.core_type = #tpu.core_type<tc>, window_params = [{transform_indices = @transform_0, window_bounds = array<i64: 128, 53>}, {pipeline_mode = #tpu.pipeline_mode<synchronous>, transform_indices = @transform_1, window_bounds = array<i64: 53, 32>}, {pipeline_mode = #tpu.pipeline_mode<synchronous>, transform_indices = @transform_2, window_bounds = array<i64: 1, 32>}, {pipeline_mode = #tpu.pipeline_mode<synchronous>, transform_indices = @transform_3, window_bounds = array<i64: 32, 10>}, {pipeline_mode = #tpu.pipeline_mode<synchronous>, transform_indices = @transform_4, window_bounds = array<i64: 1, 10>}, {pipeline_mode = #tpu.pipeline_mode<synchronous>, transform_indices = @transform_5, window_bounds = array<i64: 10, 1>}, {pipeline_mode = #tpu.pipeline_mode<synchronous>, transform_indices = @transform_6, window_bounds = array<i64: 1, 1>}, {transform_indices = @transform_7, window_bounds = array<i64: 128, 1>}]} {
    %c0 = arith.constant 0 : index
    %c0_0 = arith.constant 0 : index
    %0 = vector.load %arg1[%c0, %c0_0] : memref<128x53xf32, #tpu.memory_space<vmem>>, vector<128x53xf32>
    %1 = arith.truncf %0 : vector<128x53xf32> to vector<128x53xbf16>
    %c0_1 = arith.constant 0 : index
    %c0_2 = arith.constant 0 : index
    %2 = vector.load %arg2[%c0_1, %c0_2] : memref<53x32xbf16, #tpu.memory_space<vmem>>, vector<53x32xbf16>
    %cst = arith.constant dense<0.000000e+00> : vector<128x32xf32>
    %3 = tpu.matmul %1, %2, %cst {dimension_numbers = #tpu.dot_dimension_numbers<[1], [0], [0], [1], [0, 0, 1, 1], [], []>} : vector<128x53xbf16>, vector<53x32xbf16>, vector<128x32xf32> -> vector<128x32xf32>
    %c0_3 = arith.constant 0 : index
    %c0_4 = arith.constant 0 : index
    %4 = vector.load %arg3[%c0_3, %c0_4] : memref<1x32xf32, #tpu.memory_space<vmem>>, vector<1x32xf32>
    %5 = vector.broadcast %4 : vector<1x32xf32> to vector<128x32xf32>
    %6 = arith.addf %3, %5 : vector<128x32xf32>
    %cst_5 = arith.constant 0.000000e+00 : f32
    %7 = vector.broadcast %cst_5 : f32 to vector<128x32xf32>
    %8 = arith.maximumf %6, %7 : vector<128x32xf32>
    %9 = arith.truncf %8 : vector<128x32xf32> to vector<128x32xbf16>
    %c0_6 = arith.constant 0 : index
    %c0_7 = arith.constant 0 : index
    %10 = vector.load %arg4[%c0_6, %c0_7] : memref<32x10xbf16, #tpu.memory_space<vmem>>, vector<32x10xbf16>
    %cst_8 = arith.constant dense<0.000000e+00> : vector<128x10xf32>
    %11 = tpu.matmul %9, %10, %cst_8 {dimension_numbers = #tpu.dot_dimension_numbers<[1], [0], [0], [1], [0, 0, 1, 1], [], []>} : vector<128x32xbf16>, vector<32x10xbf16>, vector<128x10xf32> -> vector<128x10xf32>
    %c0_9 = arith.constant 0 : index
    %c0_10 = arith.constant 0 : index
    %12 = vector.load %arg5[%c0_9, %c0_10] : memref<1x10xf32, #tpu.memory_space<vmem>>, vector<1x10xf32>
    %13 = vector.broadcast %12 : vector<1x10xf32> to vector<128x10xf32>
    %14 = arith.addf %11, %13 : vector<128x10xf32>
    %cst_11 = arith.constant 0.000000e+00 : f32
    %15 = vector.broadcast %cst_11 : f32 to vector<128x10xf32>
    %16 = arith.maximumf %14, %15 : vector<128x10xf32>
    %17 = arith.truncf %16 : vector<128x10xf32> to vector<128x10xbf16>
    %c0_12 = arith.constant 0 : index
    %c0_13 = arith.constant 0 : index
    %18 = vector.load %arg6[%c0_12, %c0_13] : memref<10x1xbf16, #tpu.memory_space<vmem>>, vector<10x1xbf16>
    %cst_14 = arith.constant dense<0.000000e+00> : vector<128x1xf32>
    %19 = tpu.matmul %17, %18, %cst_14 {dimension_numbers = #tpu.dot_dimension_numbers<[1], [0], [0], [1], [0, 0, 1, 1], [], []>} : vector<128x10xbf16>, vector<10x1xbf16>, vector<128x1xf32> -> vector<128x1xf32>
    %c0_15 = arith.constant 0 : index
    %c0_16 = arith.constant 0 : index
    %20 = vector.load %arg7[%c0_15, %c0_16] : memref<1x1xf32, #tpu.memory_space<vmem>>, vector<1x1xf32>
    %21 = vector.broadcast %20 : vector<1x1xf32> to vector<128x1xf32>
    %22 = arith.addf %19, %21 : vector<128x1xf32>
    %c0_17 = arith.constant 0 : index
    %c0_18 = arith.constant 0 : index
    %23 = vector.load %arg8[%c0_17, %c0_18] : memref<128x1xf32, #tpu.memory_space<vmem>>, vector<128x1xf32>
    tpu.vector_store %arg8[%c0_17, %c0_18], %22 {strides = array<i32>} : memref<128x1xf32, #tpu.memory_space<vmem>>, vector<128x1xf32>,
    return
  }
  func.func @transform_0(%arg0: i32) -> (i32, i32) {
    %c0_i32 = arith.constant 0 : i32
    %c0_i32_0 = arith.constant 0 : i32
    return %arg0, %c0_i32 : i32, i32
  }
  func.func @transform_1(%arg0: i32) -> (i32, i32) {
    %c0_i32 = arith.constant 0 : i32
    %c0_i32_0 = arith.constant 0 : i32
    %c0_i32_1 = arith.constant 0 : i32
    return %c0_i32, %c0_i32_0 : i32, i32
  }
  func.func @transform_2(%arg0: i32) -> (i32, i32) {
    %c0_i32 = arith.constant 0 : i32
    %c0_i32_0 = arith.constant 0 : i32
    %c0_i32_1 = arith.constant 0 : i32
    return %c0_i32, %c0_i32_0 : i32, i32
  }
  func.func @transform_3(%arg0: i32) -> (i32, i32) {
    %c0_i32 = arith.constant 0 : i32
    %c0_i32_0 = arith.constant 0 : i32
    %c0_i32_1 = arith.constant 0 : i32
    return %c0_i32, %c0_i32_0 : i32, i32
  }
  func.func @transform_4(%arg0: i32) -> (i32, i32) {
    %c0_i32 = arith.constant 0 : i32
    %c0_i32_0 = arith.constant 0 : i32
    %c0_i32_1 = arith.constant 0 : i32
    return %c0_i32, %c0_i32_0 : i32, i32
  }
  func.func @transform_5(%arg0: i32) -> (i32, i32) {
    %c0_i32 = arith.constant 0 : i32
    %c0_i32_0 = arith.constant 0 : i32
    %c0_i32_1 = arith.constant 0 : i32
    return %c0_i32, %c0_i32_0 : i32, i32
  }
  func.func @transform_6(%arg0: i32) -> (i32, i32) {
    %c0_i32 = arith.constant 0 : i32
    %c0_i32_0 = arith.constant 0 : i32
    %c0_i32_1 = arith.constant 0 : i32
    return %c0_i32, %c0_i32_0 : i32, i32
  }
  func.func @transform_7(%arg0: i32) -> (i32, i32) {
    %c0_i32 = arith.constant 0 : i32
    %c0_i32_0 = arith.constant 0 : i32
    return %arg0, %c0_i32 : i32, i32
  }
}

</mosaic_0001>

<llo_original>
// kernel: tpu_custom_call.1
$region0: #{tpu_custom_call.1}
  #allocation0 [shape = 'u32[]', space=smem, size = 0x4, offset = 0x4, fixed_abs, tag = 'smem constant byte address 0x4 - core index']
  #allocation1 [shape = 'u32[144,128]{1,0:T(1,128)}', space=vmem, size = 0x12000, scoped, tag = 'internal scratch']
  #allocation2 [shape = 'f32[1,1]{1,0:T(1,128)S(1)}', space=vmem, size = 0x200, scoped, tag = 'scoped memory for tpu_custom_call.1']
  %s0 = inlined_call_operand.vmem [shape: f32[8,53], index: 0, kind: input, shape index: {}]
  %s1 = inlined_call_operand.vmem [shape: bf16[53,32], index: 1, kind: input, shape index: {}]
  %s2 = inlined_call_operand.vmem [shape: f32[1,32], index: 2, kind: input, shape index: {}]
  %s3 = inlined_call_operand.vmem [shape: bf16[32,10], index: 3, kind: input, shape index: {}]
  %s4 = inlined_call_operand.vmem [shape: f32[1,10], index: 4, kind: input, shape index: {}]
  %s5 = inlined_call_operand.vmem [shape: bf16[10,1], index: 5, kind: input, shape index: {}]
  %s6 = inlined_call_operand.<no memory space> [shape: f32[1,1], index: 6, kind: input, shape index: {}]
  %s7 = inlined_call_operand.vmem [shape: f32[8,1], index: 7, kind: output, shape index: {}]
  %s8 = sld [smem:[#allocation0]]
  $region72: #{tpu_custom_call.1} parent=0
    _
  %s10 = ssub.s32 1, %s8
  %s11 = scalar_select 0, %s10, %s8
  %v12 = vstv %s6
  %13 = vst [vmem:[#allocation2] sm:$0x1] %v12
  $region1: #{tpu_custom_call.1} parent=0
    #allocation3 [shape = 'u8[65536]{0}', space=vmem, size = 0x10000, scoped, tag = 'output window, operand 0, single buffered']
    // Predicated region
    $region2: #{tpu_custom_call.1} parent=1 // pred_check
      _
    $region3: #{tpu_custom_call.1} parent=1 // pred_check_branch
      %15 = sbr.rel (0) target = $region5
    $region4: #{tpu_custom_call.1} parent=1 // pred_region
      _
    $region5: #{tpu_custom_call.1} parent=1 // pred_fallthru
      _
    // Predicated region
    $region6: #{tpu_custom_call.1} parent=1 // pred_check
      _
    $region7: #{tpu_custom_call.1} parent=1 // pred_check_branch
      %17 = sbr.rel (0) target = $region9
    $region8: #{tpu_custom_call.1} parent=1 // pred_region
      _
    $region9: #{tpu_custom_call.1} parent=1 // pred_fallthru
      _
    // Predicated region
    $region10: #{tpu_custom_call.1} parent=1 // pred_check
      _
    $region11: #{tpu_custom_call.1} parent=1 // pred_check_branch
      %19 = sbr.rel (0) target = $region13
    $region12: #{tpu_custom_call.1} parent=1 // pred_region
      _
    $region13: #{tpu_custom_call.1} parent=1 // pred_fallthru
      _
    // Predicated region
    $region14: #{tpu_custom_call.1} parent=1 // pred_check
      _
    $region15: #{tpu_custom_call.1} parent=1 // pred_check_branch
      %21 = sbr.rel (0) target = $region17
    $region16: #{tpu_custom_call.1} parent=1 // pred_region
      _
    $region17: #{tpu_custom_call.1} parent=1 // pred_fallthru
      _
    // Predicated region
    $region18: #{tpu_custom_call.1} parent=1 // pred_check
      _
    $region19: #{tpu_custom_call.1} parent=1 // pred_check_branch
      %23 = sbr.rel (0) target = $region21
    $region20: #{tpu_custom_call.1} parent=1 // pred_region
      _
    $region21: #{tpu_custom_call.1} parent=1 // pred_fallthru
      _
    // Predicated region
    $region22: #{tpu_custom_call.1} parent=1 // pred_check
      _
    $region23: #{tpu_custom_call.1} parent=1 // pred_check_branch
      %25 = sbr.rel (0) target = $region25
    $region24: #{tpu_custom_call.1} parent=1 // pred_region
      _
    $region25: #{tpu_custom_call.1} parent=1 // pred_fallthru
      _
    // Predicated region
    $region26: #{tpu_custom_call.1} parent=1 // pred_check
      _
    $region27: #{tpu_custom_call.1} parent=1 // pred_check_branch
      %27 = sbr.rel (0) target = $region29
    $region28: #{tpu_custom_call.1} parent=1 // pred_region
      _
    $region29: #{tpu_custom_call.1} parent=1 // pred_fallthru
      _
    %v29 = vld [vmem:[%s0] sm:$0xff]
    %v30 = vld [vmem:[%s0 + $0x8] sm:$0xff]
    %v31 = vld [vmem:[%s0 + $0x10] sm:$0xff]
    %v32 = vld [vmem:[%s0 + $0x18] sm:$0xff]
    %v33 = vld [vmem:[%s0 + $0x20] sm:$0xff]
    %v34 = vld [vmem:[%s0 + $0x28] sm:$0xff]
    %v35 = vld [vmem:[%s0 + $0x30] sm:$0xff]
    %v36 = vld [vmem:[%s0 + $0x38] sm:$0xff]
    %v37 = vld [vmem:[%s0 + $0x40] sm:$0xff]
    %v38 = vld [vmem:[%s0 + $0x48] sm:$0xff]
    %v39 = vld [vmem:[%s0 + $0x50] sm:$0xff]
    %v40 = vld [vmem:[%s0 + $0x58] sm:$0xff]
    %v41 = vld [vmem:[%s0 + $0x60] sm:$0xff]
    %v42 = vld [vmem:[%s0 + $0x68] sm:$0xff]
    %v43 = vld [vmem:[%s0 + $0x70] sm:$0xff]
    %v44 = vld [vmem:[%s0 + $0x78] sm:$0xff]
    %v45 = vpack.c.bf16 %v30, %v29
    %v46 = vpack.c.bf16 %v32, %v31
    %v47 = vpack.c.bf16 %v34, %v33
    %v48 = vpack.c.bf16 %v36, %v35
    %v49 = vpack.c.bf16 %v38, %v37
    %v50 = vpack.c.bf16 %v40, %v39
    %v51 = vpack.c.bf16 %v42, %v41
    %v52 = vpack.c.bf16 %v44, %v43
    %v53 = vld [vmem:[%s1] sm:$0xf]
    %v54 = vld [vmem:[%s1 + $0x4] sm:$0xf]
    %v55 = vld [vmem:[%s1 + $0x8] sm:$0xf]
    %v56 = vld [vmem:[%s1 + $0xc] sm:$0xf]
    %v57 = vld [vmem:[%s1 + $0x10] sm:$0xf]
    %v58 = vld [vmem:[%s1 + $0x14] sm:$0xf]
    %v59 = vld [vmem:[%s1 + $0x18] sm:$0x7]
    %v60 = vld [vmem:[%s2] sm:$0x1]
    %v62 = vlaneseq
    %v63 = vshrl.u32 %v62, 7
    %v64 = vsub.s32 0, %v63
    %v65 = vrot.slane %v60, %v64
    %v74 = vunpack.c.l.b16 %v53
    %v75 = vunpack.c.l.b16 %v54
    %v76 = vunpack.c.l.b16 %v55
    %v77 = vunpack.c.l.b16 %v56
    %v78 = vunpack.c.l.b16 %v57
    %v79 = vunpack.c.l.b16 %v58
    %v80 = vunpack.c.l.b16 %v59
    %v81 = vpack.c.b16 %v75, %v74
    %v82 = vpack.c.b16 %v77, %v76
    %v83 = vpack.c.b16 %v79, %v78
    %v84 = vpack.c.b16 %v80, %v80
    %vm88 = vcmask 433152
    %v90 = vsel %vm88, %v45, 0
    %v93 = vsel %vm88, %v46, 0
    %v96 = vsel %vm88, %v47, 0
    %v99 = vsel %vm88, %v48, 0
    %v102 = vsel %vm88, %v49, 0
    %v105 = vsel %vm88, %v50, 0
    %v108 = vsel %vm88, %v51, 0
    %v111 = vsel %vm88, %v52, 0
    %vm113 = vcmask 1041408
    %vm114 = vcmask 1042432
    %v115 = vsel %vm113, 4294967295, 65535
    %v116 = vsel %vm114, %v115, 0
    %v118 = vand.u32 %v84, %v116
    %120 = vmatprep.subr.bf16.mxu0 0
    %121 = vmatpush1.bf16.msra.mxu0 %v81
    %122 = vmatprep.subr.bf16.mxu0 0
    %123 = vmatpush1.bf16.msra.mxu0 %v82
    %124 = vmatprep.subr.bf16.mxu0 0
    %125 = vmatpush1.bf16.msra.mxu0 %v83
    %126 = vmatprep.subr.bf16.mxu0 0
    %127 = vmatpush1.bf16.msra.mxu0 %v118
    %128 = vmatprep.subr.bf16.mxu0 0
    %129 = vmatpush1.bf16.msra.mxu0 0
    %130 = vmatprep.subr.bf16.mxu0 0
    %131 = vmatpush1.bf16.msra.mxu0 0
    %132 = vmatprep.subr.bf16.mxu0 0
    %133 = vmatpush1.bf16.msra.mxu0 0
    %134 = vmatprep.subr.bf16.mxu0 0
    %135 = vmatpush1.bf16.msra.mxu0 0
    %136 = vmatprep.subr.bf16.mxu0 0
    %137 = vmatpush1.bf16.msra.mxu0 0
    %138 = vmatprep.subr.bf16.mxu0 0
    %139 = vmatpush1.bf16.msra.mxu0 0
    %140 = vmatprep.subr.bf16.mxu0 0
    %141 = vmatpush1.bf16.msra.mxu0 0
    %142 = vmatprep.subr.bf16.mxu0 0
    %143 = vmatpush1.bf16.msra.mxu0 0
    %144 = vmatprep.subr.bf16.mxu0 0
    %145 = vmatpush1.bf16.msra.mxu0 0
    %146 = vmatprep.subr.bf16.mxu0 0
    %147 = vmatpush1.bf16.msra.mxu0 0
    %148 = vmatprep.subr.bf16.mxu0 0
    %149 = vmatpush1.bf16.msra.mxu0 0
    %150 = vmatprep.subr.bf16.mxu0 0
    %151 = vmatpush1.bf16.msra.mxu0 0
    %152 = vmatprep.mubr.bf16.mxu0 0
    %153 = vmatmul.mubr.bf16.gmra.mrb[0].mxu0 %v90
    %v154 = vpop.f32.mrb[0].mxu0
    %v155 = vadd.f32 %v65, %v154
    %v156 = vpop.f32.mrb[0].mxu0
    %v157 = vpop.f32.mrb[0].mxu0
    %v158 = vadd.f32 %v65, %v157
    %v159 = vpop.f32.mrb[0].mxu0
    %160 = vmatprep.mubr.bf16.mxu0 0
    %161 = vmatmul.mubr.bf16.gmra.mrb[0].mxu0 %v93
    %v162 = vpop.f32.mrb[0].mxu0
    %v163 = vadd.f32 %v65, %v162
    %v164 = vpop.f32.mrb[0].mxu0
    %v165 = vpop.f32.mrb[0].mxu0
    %v166 = vadd.f32 %v65, %v165
    %v167 = vpop.f32.mrb[0].mxu0
    %168 = vmatprep.mubr.bf16.mxu0 0
    %169 = vmatmul.mubr.bf16.gmra.mrb[0].mxu0 %v96
    %v170 = vpop.f32.mrb[0].mxu0
    %v171 = vadd.f32 %v65, %v170
    %v172 = vpop.f32.mrb[0].mxu0
    %v173 = vpop.f32.mrb[0].mxu0
    %v174 = vadd.f32 %v65, %v173
    %v175 = vpop.f32.mrb[0].mxu0
    %176 = vmatprep.mubr.bf16.mxu0 0
    %177 = vmatmul.mubr.bf16.gmra.mrb[0].mxu0 %v99
    %v178 = vpop.f32.mrb[0].mxu0
    %v179 = vadd.f32 %v65, %v178
    %v180 = vpop.f32.mrb[0].mxu0
    %v181 = vpop.f32.mrb[0].mxu0
    %v182 = vadd.f32 %v65, %v181
    %v183 = vpop.f32.mrb[0].mxu0
    %184 = vmatprep.mubr.bf16.mxu0 0
    %185 = vmatmul.mubr.bf16.gmra.mrb[0].mxu0 %v102
    %v186 = vpop.f32.mrb[0].mxu0
    %v187 = vadd.f32 %v65, %v186
    %v188 = vpop.f32.mrb[0].mxu0
    %v189 = vpop.f32.mrb[0].mxu0
    %v190 = vadd.f32 %v65, %v189
    %v191 = vpop.f32.mrb[0].mxu0
    %192 = vmatprep.mubr.bf16.mxu0 0
    %193 = vmatmul.mubr.bf16.gmra.mrb[0].mxu0 %v105
    %v194 = vpop.f32.mrb[0].mxu0
    %v195 = vadd.f32 %v65, %v194
    %v196 = vpop.f32.mrb[0].mxu0
    %v197 = vpop.f32.mrb[0].mxu0
    %v198 = vadd.f32 %v65, %v197
    %v199 = vpop.f32.mrb[0].mxu0
    %200 = vmatprep.mubr.bf16.mxu0 0
    %201 = vmatmul.mubr.bf16.gmra.mrb[0].mxu0 %v108
    %v202 = vpop.f32.mrb[0].mxu0
    %v203 = vadd.f32 %v65, %v202
    %v204 = vpop.f32.mrb[0].mxu0
    %v205 = vpop.f32.mrb[0].mxu0
    %v206 = vadd.f32 %v65, %v205
    %v207 = vpop.f32.mrb[0].mxu0
    %208 = vmatprep.mubr.bf16.mxu0 0
    %209 = vmatmul.mubr.bf16.gmra.mrb[0].mxu0 %v111
    %v210 = vpop.f32.mrb[0].mxu0
    %v211 = vadd.f32 %v65, %v210
    %v212 = vpop.f32.mrb[0].mxu0
    %v213 = vpop.f32.mrb[0].mxu0
    %v214 = vadd.f32 %v65, %v213
    %v215 = vpop.f32.mrb[0].mxu0
    %216 = vdwg.mxu0
    %v217 = vmax.f32 %v155, 0.0
    %v218 = vmax.f32 %v158, 0.0
    %v219 = vmax.f32 %v163, 0.0
    %v220 = vmax.f32 %v166, 0.0
    %v221 = vmax.f32 %v171, 0.0
    %v222 = vmax.f32 %v174, 0.0
    %v223 = vmax.f32 %v179, 0.0
    %v224 = vmax.f32 %v182, 0.0
    %v225 = vmax.f32 %v187, 0.0
    %v226 = vmax.f32 %v190, 0.0
    %v227 = vmax.f32 %v195, 0.0
    %v228 = vmax.f32 %v198, 0.0
    %v229 = vmax.f32 %v203, 0.0
    %v230 = vmax.f32 %v206, 0.0
    %v231 = vmax.f32 %v211, 0.0
    %v232 = vmax.f32 %v214, 0.0
    %v233 = vpack.c.bf16 %v218, %v217
    %v234 = vpack.c.bf16 %v220, %v219
    %v235 = vpack.c.bf16 %v222, %v221
    %v236 = vpack.c.bf16 %v224, %v223
    %v237 = vpack.c.bf16 %v226, %v225
    %v238 = vpack.c.bf16 %v228, %v227
    %v239 = vpack.c.bf16 %v230, %v229
    %v240 = vpack.c.bf16 %v232, %v231
    %v241 = vld [vmem:[%s3] sm:$0xf]
    %v242 = vld [vmem:[%s3 + $0x4] sm:$0xf]
    %v243 = vld [vmem:[%s3 + $0x8] sm:$0xf]
    %v244 = vld [vmem:[%s3 + $0xc] sm:$0xf]
    %v245 = vld [vmem:[%s4] sm:$0x1]
    %v247 = vlaneseq
    %v248 = vshrl.u32 %v247, 7
    %v249 = vsub.s32 0, %v248
    %v250 = vrot.slane %v245, %v249
    %v256 = vunpack.c.l.b16 %v241
    %v257 = vunpack.c.l.b16 %v242
    %v258 = vunpack.c.l.b16 %v243
    %v259 = vunpack.c.l.b16 %v244
    %v260 = vpack.c.b16 %v257, %v256
    %v261 = vpack.c.b16 %v259, %v258
    %vm264 = vcmask 261120
    %v266 = vsel %vm264, %v233, 0
    %v269 = vsel %vm264, %v234, 0
    %v272 = vsel %vm264, %v235, 0
    %v275 = vsel %vm264, %v236, 0
    %v278 = vsel %vm264, %v237, 0
    %v281 = vsel %vm264, %v238, 0
    %v284 = vsel %vm264, %v239, 0
    %v287 = vsel %vm264, %v240, 0
    %289 = vmatprep.subr.bf16.mxu0 0
    %290 = vmatpush1.bf16.msra.mxu0 %v260
    %291 = vmatprep.subr.bf16.mxu0 0
    %292 = vmatpush1.bf16.msra.mxu0 %v261
    %293 = vmatprep.subr.bf16.mxu0 0
    %294 = vmatpush1.bf16.msra.mxu0 0
    %295 = vmatprep.subr.bf16.mxu0 0
    %296 = vmatpush1.bf16.msra.mxu0 0
    %297 = vmatprep.subr.bf16.mxu0 0
    %298 = vmatpush1.bf16.msra.mxu0 0
    %299 = vmatprep.subr.bf16.mxu0 0
    %300 = vmatpush1.bf16.msra.mxu0 0
    %301 = vmatprep.subr.bf16.mxu0 0
    %302 = vmatpush1.bf16.msra.mxu0 0
    %303 = vmatprep.subr.bf16.mxu0 0
    %304 = vmatpush1.bf16.msra.mxu0 0
    %305 = vmatprep.subr.bf16.mxu0 0
    %306 = vmatpush1.bf16.msra.mxu0 0
    %307 = vmatprep.subr.bf16.mxu0 0
    %308 = vmatpush1.bf16.msra.mxu0 0
    %309 = vmatprep.subr.bf16.mxu0 0
    %310 = vmatpush1.bf16.msra.mxu0 0
    %311 = vmatprep.subr.bf16.mxu0 0
    %312 = vmatpush1.bf16.msra.mxu0 0
    %313 = vmatprep.subr.bf16.mxu0 0
    %314 = vmatpush1.bf16.msra.mxu0 0
    %315 = vmatprep.subr.bf16.mxu0 0
    %316 = vmatpush1.bf16.msra.mxu0 0
    %317 = vmatprep.subr.bf16.mxu0 0
    %318 = vmatpush1.bf16.msra.mxu0 0
    %319 = vmatprep.subr.bf16.mxu0 0
    %320 = vmatpush1.bf16.msra.mxu0 0
    %321 = vmatprep.mubr.bf16.mxu0 0
    %322 = vmatmul.mubr.bf16.gmra.mrb[0].mxu0 %v266
    %v323 = vpop.f32.mrb[0].mxu0
    %v324 = vadd.f32 %v250, %v323
    %v325 = vpop.f32.mrb[0].mxu0
    %v326 = vpop.f32.mrb[0].mxu0
    %v327 = vadd.f32 %v250, %v326
    %v328 = vpop.f32.mrb[0].mxu0
    %329 = vmatprep.mubr.bf16.mxu0 0
    %330 = vmatmul.mubr.bf16.gmra.mrb[0].mxu0 %v269
    %v331 = vpop.f32.mrb[0].mxu0
    %v332 = vadd.f32 %v250, %v331
    %v333 = vpop.f32.mrb[0].mxu0
    %v334 = vpop.f32.mrb[0].mxu0
    %v335 = vadd.f32 %v250, %v334
    %v336 = vpop.f32.mrb[0].mxu0
    %337 = vmatprep.mubr.bf16.mxu0 0
    %338 = vmatmul.mubr.bf16.gmra.mrb[0].mxu0 %v272
    %v339 = vpop.f32.mrb[0].mxu0
    %v340 = vadd.f32 %v250, %v339
    %v341 = vpop.f32.mrb[0].mxu0
    %v342 = vpop.f32.mrb[0].mxu0
    %v343 = vadd.f32 %v250, %v342
    %v344 = vpop.f32.mrb[0].mxu0
    %345 = vmatprep.mubr.bf16.mxu0 0
    %346 = vmatmul.mubr.bf16.gmra.mrb[0].mxu0 %v275
    %v347 = vpop.f32.mrb[0].mxu0
    %v348 = vadd.f32 %v250, %v347
    %v349 = vpop.f32.mrb[0].mxu0
    %v350 = vpop.f32.mrb[0].mxu0
    %v351 = vadd.f32 %v250, %v350
    %v352 = vpop.f32.mrb[0].mxu0
    %353 = vmatprep.mubr.bf16.mxu0 0
    %354 = vmatmul.mubr.bf16.gmra.mrb[0].mxu0 %v278
    %v355 = vpop.f32.mrb[0].mxu0
    %v356 = vadd.f32 %v250, %v355
    %v357 = vpop.f32.mrb[0].mxu0
    %v358 = vpop.f32.mrb[0].mxu0
    %v359 = vadd.f32 %v250, %v358
    %v360 = vpop.f32.mrb[0].mxu0
    %361 = vmatprep.mubr.bf16.mxu0 0
    %362 = vmatmul.mubr.bf16.gmra.mrb[0].mxu0 %v281
    %v363 = vpop.f32.mrb[0].mxu0
    %v364 = vadd.f32 %v250, %v363
    %v365 = vpop.f32.mrb[0].mxu0
    %v366 = vpop.f32.mrb[0].mxu0
    %v367 = vadd.f32 %v250, %v366
    %v368 = vpop.f32.mrb[0].mxu0
    %369 = vmatprep.mubr.bf16.mxu0 0
    %370 = vmatmul.mubr.bf16.gmra.mrb[0].mxu0 %v284
    %v371 = vpop.f32.mrb[0].mxu0
    %v372 = vadd.f32 %v250, %v371
    %v373 = vpop.f32.mrb[0].mxu0
    %v374 = vpop.f32.mrb[0].mxu0
    %v375 = vadd.f32 %v250, %v374
    %v376 = vpop.f32.mrb[0].mxu0
    %377 = vmatprep.mubr.bf16.mxu0 0
    %378 = vmatmul.mubr.bf16.gmra.mrb[0].mxu0 %v287
    %v379 = vpop.f32.mrb[0].mxu0
    %v380 = vadd.f32 %v250, %v379
    %v381 = vpop.f32.mrb[0].mxu0
    %v382 = vpop.f32.mrb[0].mxu0
    %v383 = vadd.f32 %v250, %v382
    %v384 = vpop.f32.mrb[0].mxu0
    %385 = vdwg.mxu0
    %v386 = vmax.f32 %v324, 0.0
    %v387 = vmax.f32 %v327, 0.0
    %v388 = vmax.f32 %v332, 0.0
    %v389 = vmax.f32 %v335, 0.0
    %v390 = vmax.f32 %v340, 0.0
    %v391 = vmax.f32 %v343, 0.0
    %v392 = vmax.f32 %v348, 0.0
    %v393 = vmax.f32 %v351, 0.0
    %v394 = vmax.f32 %v356, 0.0
    %v395 = vmax.f32 %v359, 0.0
    %v396 = vmax.f32 %v364, 0.0
    %v397 = vmax.f32 %v367, 0.0
    %v398 = vmax.f32 %v372, 0.0
    %v399 = vmax.f32 %v375, 0.0
    %v400 = vmax.f32 %v380, 0.0
    %v401 = vmax.f32 %v383, 0.0
    %v402 = vpack.c.bf16 %v387, %v386
    %v403 = vpack.c.bf16 %v389, %v388
    %v404 = vpack.c.bf16 %v391, %v390
    %v405 = vpack.c.bf16 %v393, %v392
    %v406 = vpack.c.bf16 %v395, %v394
    %v407 = vpack.c.bf16 %v397, %v396
    %v408 = vpack.c.bf16 %v399, %v398
    %v409 = vpack.c.bf16 %v401, %v400
    %v410 = vld [vmem:[%s5] sm:$0xf]
    %v411 = vld [vmem:[%s5 + $0x4] sm:$0x1]
    %v412 = vld [vmem:[#allocation2] sm:$0x1]
    %v414 = vlaneseq
    %v415 = vshrl.u32 %v414, 7
    %v416 = vsub.s32 0, %v415
    %v417 = vrot.slane %v412, %v416
    %v421 = vunpack.c.l.b16 %v410
    %v422 = vunpack.c.l.b16 %v411
    %v423 = vpack.c.b16 %v422, %v421
    %vm424 = vcmask 80896
    %v426 = vsel %vm424, %v402, 0
    %v429 = vsel %vm424, %v403, 0
    %v432 = vsel %vm424, %v404, 0
    %v435 = vsel %vm424, %v405, 0
    %v438 = vsel %vm424, %v406, 0
    %v441 = vsel %vm424, %v407, 0
    %v444 = vsel %vm424, %v408, 0
    %v447 = vsel %vm424, %v409, 0
    %vm449 = vcmask 1044480
    %v451 = vsel %vm449, %v423, 0
    %453 = vmatprep.subr.bf16.mxu0 0
    %454 = vmatpush1.bf16.msra.mxu0 %v451
    %455 = vmatprep.subr.bf16.mxu0 0
    %456 = vmatpush1.bf16.msra.mxu0 0
    %457 = vmatprep.subr.bf16.mxu0 0
    %458 = vmatpush1.bf16.msra.mxu0 0
    %459 = vmatprep.subr.bf16.mxu0 0
    %460 = vmatpush1.bf16.msra.mxu0 0
    %461 = vmatprep.subr.bf16.mxu0 0
    %462 = vmatpush1.bf16.msra.mxu0 0
    %463 = vmatprep.subr.bf16.mxu0 0
    %464 = vmatpush1.bf16.msra.mxu0 0
    %465 = vmatprep.subr.bf16.mxu0 0
    %466 = vmatpush1.bf16.msra.mxu0 0
    %467 = vmatprep.subr.bf16.mxu0 0
    %468 = vmatpush1.bf16.msra.mxu0 0
    %469 = vmatprep.subr.bf16.mxu0 0
    %470 = vmatpush1.bf16.msra.mxu0 0
    %471 = vmatprep.subr.bf16.mxu0 0
    %472 = vmatpush1.bf16.msra.mxu0 0
    %473 = vmatprep.subr.bf16.mxu0 0
    %474 = vmatpush1.bf16.msra.mxu0 0
    %475 = vmatprep.subr.bf16.mxu0 0
    %476 = vmatpush1.bf16.msra.mxu0 0
    %477 = vmatprep.subr.bf16.mxu0 0
    %478 = vmatpush1.bf16.msra.mxu0 0
    %479 = vmatprep.subr.bf16.mxu0 0
    %480 = vmatpush1.bf16.msra.mxu0 0
    %481 = vmatprep.subr.bf16.mxu0 0
    %482 = vmatpush1.bf16.msra.mxu0 0
    %483 = vmatprep.subr.bf16.mxu0 0
    %484 = vmatpush1.bf16.msra.mxu0 0
    %485 = vmatprep.mubr.bf16.mxu0 0
    %486 = vmatmul.mubr.bf16.gmra.mrb[0].mxu0 %v426
    %v487 = vpop.f32.mrb[0].mxu0
    %v488 = vadd.f32 %v417, %v487
    %v489 = vpop.f32.mrb[0].mxu0
    %v490 = vpop.f32.mrb[0].mxu0
    %v491 = vadd.f32 %v417, %v490
    %v492 = vpop.f32.mrb[0].mxu0
    %493 = vmatprep.mubr.bf16.mxu0 0
    %494 = vmatmul.mubr.bf16.gmra.mrb[0].mxu0 %v429
    %v495 = vpop.f32.mrb[0].mxu0
    %v496 = vadd.f32 %v417, %v495
    %v497 = vpop.f32.mrb[0].mxu0
    %v498 = vpop.f32.mrb[0].mxu0
    %v499 = vadd.f32 %v417, %v498
    %v500 = vpop.f32.mrb[0].mxu0
    %501 = vmatprep.mubr.bf16.mxu0 0
    %502 = vmatmul.mubr.bf16.gmra.mrb[0].mxu0 %v432
    %v503 = vpop.f32.mrb[0].mxu0
    %v504 = vadd.f32 %v417, %v503
    %v505 = vpop.f32.mrb[0].mxu0
    %v506 = vpop.f32.mrb[0].mxu0
    %v507 = vadd.f32 %v417, %v506
    %v508 = vpop.f32.mrb[0].mxu0
    %509 = vmatprep.mubr.bf16.mxu0 0
    %510 = vmatmul.mubr.bf16.gmra.mrb[0].mxu0 %v435
    %v511 = vpop.f32.mrb[0].mxu0
    %v512 = vadd.f32 %v417, %v511
    %v513 = vpop.f32.mrb[0].mxu0
    %v514 = vpop.f32.mrb[0].mxu0
    %v515 = vadd.f32 %v417, %v514
    %v516 = vpop.f32.mrb[0].mxu0
    %517 = vmatprep.mubr.bf16.mxu0 0
    %518 = vmatmul.mubr.bf16.gmra.mrb[0].mxu0 %v438
    %v519 = vpop.f32.mrb[0].mxu0
    %v520 = vadd.f32 %v417, %v519
    %v521 = vpop.f32.mrb[0].mxu0
    %v522 = vpop.f32.mrb[0].mxu0
    %v523 = vadd.f32 %v417, %v522
    %v524 = vpop.f32.mrb[0].mxu0
    %525 = vmatprep.mubr.bf16.mxu0 0
    %526 = vmatmul.mubr.bf16.gmra.mrb[0].mxu0 %v441
    %v527 = vpop.f32.mrb[0].mxu0
    %v528 = vadd.f32 %v417, %v527
    %v529 = vpop.f32.mrb[0].mxu0
    %v530 = vpop.f32.mrb[0].mxu0
    %v531 = vadd.f32 %v417, %v530
    %v532 = vpop.f32.mrb[0].mxu0
    %533 = vmatprep.mubr.bf16.mxu0 0
    %534 = vmatmul.mubr.bf16.gmra.mrb[0].mxu0 %v444
    %v535 = vpop.f32.mrb[0].mxu0
    %v536 = vadd.f32 %v417, %v535
    %v537 = vpop.f32.mrb[0].mxu0
    %v538 = vpop.f32.mrb[0].mxu0
    %v539 = vadd.f32 %v417, %v538
    %v540 = vpop.f32.mrb[0].mxu0
    %541 = vmatprep.mubr.bf16.mxu0 0
    %542 = vmatmul.mubr.bf16.gmra.mrb[0].mxu0 %v447
    %v543 = vpop.f32.mrb[0].mxu0
    %v544 = vadd.f32 %v417, %v543
    %v545 = vpop.f32.mrb[0].mxu0
    %v546 = vpop.f32.mrb[0].mxu0
    %v547 = vadd.f32 %v417, %v546
    %v548 = vpop.f32.mrb[0].mxu0
    %549 = vdwg.mxu0
    %vm550 = vcmask 7168
    %551 = vst.msk [vmem:[#allocation3] sm:$0xff] %vm550, %v488
    %552 = vst.msk [vmem:[#allocation3 + $0x8] sm:$0xff] %vm550, %v491
    %553 = vst.msk [vmem:[#allocation3 + $0x10] sm:$0xff] %vm550, %v496
    %554 = vst.msk [vmem:[#allocation3 + $0x18] sm:$0xff] %vm550, %v499
    %555 = vst.msk [vmem:[#allocation3 + $0x20] sm:$0xff] %vm550, %v504
    %556 = vst.msk [vmem:[#allocation3 + $0x28] sm:$0xff] %vm550, %v507
    %557 = vst.msk [vmem:[#allocation3 + $0x30] sm:$0xff] %vm550, %v512
    %558 = vst.msk [vmem:[#allocation3 + $0x38] sm:$0xff] %vm550, %v515
    %559 = vst.msk [vmem:[#allocation3 + $0x40] sm:$0xff] %vm550, %v520
    %560 = vst.msk [vmem:[#allocation3 + $0x48] sm:$0xff] %vm550, %v523
    %561 = vst.msk [vmem:[#allocation3 + $0x50] sm:$0xff] %vm550, %v528
    %562 = vst.msk [vmem:[#allocation3 + $0x58] sm:$0xff] %vm550, %v531
    %563 = vst.msk [vmem:[#allocation3 + $0x60] sm:$0xff] %vm550, %v536
    %564 = vst.msk [vmem:[#allocation3 + $0x68] sm:$0xff] %vm550, %v539
    %565 = vst.msk [vmem:[#allocation3 + $0x70] sm:$0xff] %vm550, %v544
    %566 = vst.msk [vmem:[#allocation3 + $0x78] sm:$0xff] %vm550, %v547
    // Predicated region
    $region30: #{tpu_custom_call.1} parent=1 // pred_check
      _
    $region31: #{tpu_custom_call.1} parent=1 // pred_check_branch
      %568 = sbr.rel (0) target = $region33
    $region32: #{tpu_custom_call.1} parent=1 // pred_region
      // Predicated region
      $region34: #{tpu_custom_call.1} parent=32 // pred_check
        _
      $region35: #{tpu_custom_call.1} parent=32 // pred_check_branch
        %570 = sbr.rel (0) target = $region37
      $region36: #{tpu_custom_call.1} parent=32 // pred_region
        // Predicated region
        $region38: #{tpu_custom_call.1} parent=36 // pred_check
          _
        $region39: #{tpu_custom_call.1} parent=36 // pred_check_branch
          %572 = sbr.rel (0) target = $region41
        $region40: #{tpu_custom_call.1} parent=36 // pred_region
          // Predicated region
          $region53: #{tpu_custom_call.1} parent=40 // pred_check
            _
          $region54: #{tpu_custom_call.1} parent=40 // pred_check_branch
            %587 = sbr.rel (0) target = $region56
          $region55: #{tpu_custom_call.1} parent=40 // pred_region
            loop: start=0, step=1, limit=1
            $region57: #{tpu_custom_call.1} parent=55 // loop_pre_header
              _
            $region58: #{tpu_custom_call.1} parent=55 // loop_header
              %s589 = sphi 0, %s593
              %p590 = scmp.ge.s32.totalorder %s589, 1
              %s594 = sphi [#allocation3], [#allocation3]
              %s595 = sphi %s7, %s7
            $region59: #{tpu_custom_call.1} parent=55 // loop_header_branch
              %592 = sbr.rel (%p590) target = $region63
            $region60: #{tpu_custom_call.1} parent=55 // loop_body
              %v596 = vld [vmem:[%s594] sm:$0xff]
              %597 = vst [vmem:[%s595] sm:$0xff] %v596
            $region61: #{tpu_custom_call.1} parent=55 // loop_footer
              %s593 = sadd.s32 1, %s589
            $region62: #{tpu_custom_call.1} parent=55 // loop_footer_branch
              %588 = sbr.rel target = $region58
            $region63: #{tpu_custom_call.1} parent=55 // loop_exit
              _
          $region56: #{tpu_custom_call.1} parent=40 // pred_fallthru
            _
          // Predicated region
          $region64: #{tpu_custom_call.1} parent=40 // pred_check
            _
          $region65: #{tpu_custom_call.1} parent=40 // pred_check_branch
            %599 = sbr.rel target = $region67
          $region66: #{tpu_custom_call.1} parent=40 // pred_region
            _
          $region67: #{tpu_custom_call.1} parent=40 // pred_fallthru
            _
        $region41: #{tpu_custom_call.1} parent=36 // pred_fallthru
          _
        // Predicated region
        $region42: #{tpu_custom_call.1} parent=36 // pred_check
          _
        $region43: #{tpu_custom_call.1} parent=36 // pred_check_branch
          %574 = sbr.rel target = $region45
        $region44: #{tpu_custom_call.1} parent=36 // pred_region
          loop: start=0, step=1, limit=1
          $region46: #{tpu_custom_call.1} parent=44 // loop_pre_header
            _
          $region47: #{tpu_custom_call.1} parent=44 // loop_header
            %s577 = sphi 0, %s581
            %p578 = scmp.ge.s32.totalorder %s577, 1
            %s582 = sphi [#allocation3], [#allocation3]
            %s583 = sphi %s7, %s7
          $region48: #{tpu_custom_call.1} parent=44 // loop_header_branch
            %580 = sbr.rel (%p578) target = $region52
          $region49: #{tpu_custom_call.1} parent=44 // loop_body
            %v584 = vld [vmem:[%s582] sm:$0xff]
            %585 = vst [vmem:[%s583] sm:$0xff] %v584
          $region50: #{tpu_custom_call.1} parent=44 // loop_footer
            %s581 = sadd.s32 1, %s577
          $region51: #{tpu_custom_call.1} parent=44 // loop_footer_branch
            %576 = sbr.rel target = $region47
          $region52: #{tpu_custom_call.1} parent=44 // loop_exit
            _
        $region45: #{tpu_custom_call.1} parent=36 // pred_fallthru
          _
      $region37: #{tpu_custom_call.1} parent=32 // pred_fallthru
        _
      %600 = vnop
    $region33: #{tpu_custom_call.1} parent=1 // pred_fallthru
      _
    // Predicated region
    $region68: #{tpu_custom_call.1} parent=1 // pred_check
      _
    $region69: #{tpu_custom_call.1} parent=1 // pred_check_branch
      %602 = sbr.rel (0) target = $region71
    $region70: #{tpu_custom_call.1} parent=1 // pred_region
      _
    $region71: #{tpu_custom_call.1} parent=1 // pred_fallthru
      _

</llo_original>
